<compile_context>
chip_gen: v7x
topology: tpu7x:2x2x1
jax: 0.10.0
libtpu: 0.0.40
codegen_flags: <defaults>
</compile_context>

<pallas_src>
import jax
import jax.numpy as jnp
from jax import lax
from jax.experimental import pallas as pl
from jax.experimental.pallas import tpu as pltpu


def _round_up(x, m):
    return ((x + m - 1) // m) * m


# ------------------------- Pallas kernel ------------------------------------

def fused_conv_squash_kernel(p_ref, w_ref, g_ref, o_ref):
    """Fused conv-as-matmul (bias via ones-column) + capsule squash.

    p_ref: (TM, Kp)     im2col patch tile, ones-column for bias (compute dtype)
    w_ref: (Kp, Cout)   flattened conv weights + bias row (compute dtype)
    g_ref: (Cout, Cout) block-diagonal group-sum matrix, f32
    o_ref: (TM, Cout)   squashed conv output, f32
    """
    acc = jnp.dot(p_ref[...], w_ref[...], preferred_element_type=jnp.float32)
    # Per-capsule sum of squares, broadcast back to every column of its group,
    # computed on the MXU so the VPU path stays lane-dense.
    l2 = jnp.dot(acc * acc, g_ref[...], preferred_element_type=jnp.float32)
    # squash scale: l2/(1+l2)/sqrt(l2) == sqrt(l2)/(1+l2).  sqrt(0)=0, so the
    # all-zero padded rows produce 0 without any select.
    scale = jnp.sqrt(l2) / (1.0 + l2)
    o_ref[...] = (acc * scale).astype(o_ref.dtype)


# ------------------------------ glue ----------------------------------------

def im2col(x, K, stride):
    """x: (N, C, H, W) -> patches (N*Ho*Wo, C*K*K), column order (c, ki, kj)."""
    N, C, H, W = x.shape
    Ho = (H - K) // stride + 1
    Wo = (W - K) // stride + 1
    cols = []
    for ki in range(K):
        for kj in range(K):
            cols.append(x[:, :, ki:ki + stride * Ho:stride,
                             kj:kj + stride * Wo:stride])
    p = jnp.stack(cols, axis=0).reshape(K, K, N, C, Ho, Wo)
    p = jnp.transpose(p, (2, 4, 5, 3, 0, 1))          # (N, Ho, Wo, C, K, K)
    return p.reshape(N * Ho * Wo, C * K * K), Ho, Wo


def primary_caps_forward(x, weight, bias, output_caps, output_dim,
                         kernel_size, stride, compute_dtype=jnp.bfloat16):
    N, Cin, H, W = x.shape
    Cout = output_caps * output_dim

    # TODO(synk): for large H/W, fuse im2col into the kernel (raw NCHW x via
    # memory_space=pl.ANY + in-VMEM patch assembly) to avoid materializing the
    # K^2/stride^2-inflated patch matrix in HBM; at these sizes the XLA im2col
    # is not the bottleneck and the in-kernel gather is left out for safety.
    patches, Ho, Wo = im2col(x, kernel_size, stride)
    R, Kdim = patches.shape

    # --- TPU-friendly shapes --------------------------------------------------
    Kb = Kdim + 1                                    # + ones column for bias
    Kp = _round_up(Kb, 8)
    # Sublane alignment of the row tile: 8 for f32 operands, 16 for bf16.
    sub = 8 if jnp.dtype(compute_dtype).itemsize >= 4 else 16

    TM = 512                                         # large tile: ~0.35us/step overhead amortized
    if R <= TM:
        # Small problem: shrink the tile so the "parallel" axis still has two
        # grid steps (feeds both v7x TensorCores; harmless on v5e/v6e).
        TM = max(sub, _round_up(-(-R // 2), sub))
    Rp = _round_up(R, TM)

    # Patches with a bias ones-column, zero-padded rows/cols.  Padded rows are
    # all-zero (no bias) so they squash to exactly 0 and are sliced away below.
    patches_b = jnp.concatenate(
        [patches, jnp.ones((R, 1), patches.dtype)], axis=1)            # (R, Kb)
    patches_p = jnp.pad(patches_b, ((0, Rp - R), (0, Kp - Kb)))
    patches_p = patches_p.astype(compute_dtype)

    # Flattened conv weights with the bias folded in as the extra K row.
    w_mat = jnp.concatenate(
        [weight.reshape(Cout, Kdim).T, bias.reshape(1, Cout)], axis=0)  # (Kb, Cout)
    w_mat = jnp.pad(w_mat, ((0, Kp - Kb), (0, 0))).astype(compute_dtype)

    # Block-diagonal group-sum matrix: columns of the same capsule share l2.
    grp = jnp.arange(Cout) // output_dim
    gmat = (grp[:, None] == grp[None, :]).astype(jnp.float32)           # (Cout, Cout)

    out_p = pl.pallas_call(
        fused_conv_squash_kernel,
        out_shape=jax.ShapeDtypeStruct((Rp, Cout), jnp.float32),
        grid=(Rp // TM,),
        in_specs=[
            pl.BlockSpec((TM, Kp), lambda i: (i, 0)),
            pl.BlockSpec((Kp, Cout), lambda i: (0, 0)),
            pl.BlockSpec((Cout, Cout), lambda i: (0, 0)),
        ],
        out_specs=pl.BlockSpec((TM, Cout), lambda i: (i, 0)),
        compiler_params=pltpu.CompilerParams(
            dimension_semantics=("parallel",)),
    )(patches_p, w_mat, gmat)

    conv_sq = out_p[:R]                                # (N*Ho*Wo, Cout), f32

    # PyTorch: view(N, caps, dim, H, W) -> permute(0,1,3,4,2) -> view(N,-1,dim).
    # squash acts on the last (output_dim) axis, which this reshuffle keeps
    # intact, so the fused kernel already applied it.
    out = conv_sq.reshape(N, Ho, Wo, output_caps, output_dim)
    out = jnp.transpose(out, (0, 3, 1, 2, 4))          # (N, caps, Ho, Wo, dim)
    return out.reshape(N, output_caps * Ho * Wo, output_dim)


# --------------------------- reference (plain JAX) ---------------------------

def reference_forward(x, weight, bias, output_caps, output_dim,
                      kernel_size, stride):
    conv = lax.conv_general_dilated(
        x, weight, (stride, stride), 'VALID',
        dimension_numbers=('NCHW', 'OIHW', 'NCHW')) + bias[None, :, None, None]
    N, C, H, W = conv.shape
    out = conv.reshape(N, output_caps, output_dim, H, W)
    out = jnp.transpose(out, (0, 1, 3, 4, 2)).reshape(N, -1, output_dim)
    lengths2 = jnp.sum(out * out, axis=2)
    lengths = jnp.sqrt(lengths2)
    scale = (lengths2 / (1.0 + lengths2) / lengths)[:, :, None]
    return out * scale


# ------------------------------- main ----------------------------------------

if __name__ == "__main__":
    # Module config (small, consistent with the forward pass).
    N, Cin, H, W = 2, 4, 16, 16
    output_caps, output_dim = 8, 4
    kernel_size, stride = 3, 2
    Cout = output_caps * output_dim

    key = jax.random.PRNGKey(0)
    kx, kw, kb = jax.random.split(key, 3)

    x = jax.random.normal(kx, (N, Cin, H, W), dtype=jnp.float32)

    # Deterministic Conv2d-style init (uniform in +-1/sqrt(fan_in)).
    fan_in = Cin * kernel_size * kernel_size
    bound = 1.0 / (fan_in ** 0.5)
    weight = jax.random.uniform(kw, (Cout, Cin, kernel_size, kernel_size),
                                minval=-bound, maxval=bound, dtype=jnp.float32)
    bias = jax.random.uniform(kb, (Cout,), minval=-bound, maxval=bound,
                              dtype=jnp.float32)

    out = primary_caps_forward(x, weight, bias, output_caps, output_dim,
                               kernel_size, stride)
    out = jax.block_until_ready(out)

    ref = jax.block_until_ready(
        reference_forward(x, weight, bias, output_caps, output_dim,
                          kernel_size, stride))

    assert out.shape == ref.shape, (out.shape, ref.shape)
    # bf16 MXU operands (f32 accumulation) vs the f32 XLA reference -> relaxed
    # tolerance, as anticipated by the performance review.
    assert jnp.allclose(out, ref, rtol=2e-2, atol=2e-2), "mismatch vs reference"

    print("KERNEL_OK")
</pallas_src>

<mosaic_0001>
module attributes {stable_mosaic.version = 11 : i64} {
  func.func @fused_conv_squash_kernel(%arg0: i32, %arg1: memref<64x40xbf16, #tpu.memory_space<vmem>>, %arg2: memref<40x32xbf16, #tpu.memory_space<vmem>>, %arg3: memref<32x32xf32, #tpu.memory_space<vmem>>, %arg4: memref<64x32xf32, #tpu.memory_space<vmem>>) attributes {dimension_semantics = [#tpu.dimension_semantics<parallel>], iteration_bounds = array<i64: 2>, scalar_prefetch = 0 : i64, scratch_operands = 0 : i64, tpu.core_type = #tpu.core_type<tc>, window_params = [{transform_indices = @transform_0, window_bounds = array<i64: 64, 40>}, {pipeline_mode = #tpu.pipeline_mode<synchronous>, transform_indices = @transform_1, window_bounds = array<i64: 40, 32>}, {pipeline_mode = #tpu.pipeline_mode<synchronous>, transform_indices = @transform_2, window_bounds = array<i64: 32, 32>}, {transform_indices = @transform_3, window_bounds = array<i64: 64, 32>}]} {
    %c0 = arith.constant 0 : index
    %c0_0 = arith.constant 0 : index
    %0 = vector.load %arg1[%c0, %c0_0] : memref<64x40xbf16, #tpu.memory_space<vmem>>, vector<64x40xbf16>
    %c0_1 = arith.constant 0 : index
    %c0_2 = arith.constant 0 : index
    %1 = vector.load %arg2[%c0_1, %c0_2] : memref<40x32xbf16, #tpu.memory_space<vmem>>, vector<40x32xbf16>
    %cst = arith.constant dense<0.000000e+00> : vector<64x32xf32>
    %2 = tpu.matmul %0, %1, %cst {dimension_numbers = #tpu.dot_dimension_numbers<[1], [0], [0], [1], [0, 0, 1, 1], [], []>} : vector<64x40xbf16>, vector<40x32xbf16>, vector<64x32xf32> -> vector<64x32xf32>
    %3 = arith.mulf %2, %2 : vector<64x32xf32>
    %c0_3 = arith.constant 0 : index
    %c0_4 = arith.constant 0 : index
    %4 = vector.load %arg3[%c0_3, %c0_4] : memref<32x32xf32, #tpu.memory_space<vmem>>, vector<32x32xf32>
    %cst_5 = arith.constant dense<0.000000e+00> : vector<64x32xf32>
    %5 = tpu.matmul %3, %4, %cst_5 {dimension_numbers = #tpu.dot_dimension_numbers<[1], [0], [0], [1], [0, 0, 1, 1], [], []>} : vector<64x32xf32>, vector<32x32xf32>, vector<64x32xf32> -> vector<64x32xf32>
    %6 = math.sqrt %5 : vector<64x32xf32>
    %cst_6 = arith.constant 1.000000e+00 : f32
    %7 = vector.broadcast %cst_6 : f32 to vector<64x32xf32>
    %8 = arith.addf %7, %5 : vector<64x32xf32>
    %9 = arith.divf %6, %8 : vector<64x32xf32>
    %10 = arith.mulf %2, %9 : vector<64x32xf32>
    %c0_7 = arith.constant 0 : index
    %c0_8 = arith.constant 0 : index
    %11 = vector.load %arg4[%c0_7, %c0_8] : memref<64x32xf32, #tpu.memory_space<vmem>>, vector<64x32xf32>
    tpu.vector_store %arg4[%c0_7, %c0_8], %10 {strides = array<i32>} : memref<64x32xf32, #tpu.memory_space<vmem>>, vector<64x32xf32>,
    return
  }
  func.func @transform_0(%arg0: i32) -> (i32, i32) {
    %c0_i32 = arith.constant 0 : i32
    %c0_i32_0 = arith.constant 0 : i32
    return %arg0, %c0_i32 : i32, i32
  }
  func.func @transform_1(%arg0: i32) -> (i32, i32) {
    %c0_i32 = arith.constant 0 : i32
    %c0_i32_0 = arith.constant 0 : i32
    %c0_i32_1 = arith.constant 0 : i32
    return %c0_i32, %c0_i32_0 : i32, i32
  }
  func.func @transform_2(%arg0: i32) -> (i32, i32) {
    %c0_i32 = arith.constant 0 : i32
    %c0_i32_0 = arith.constant 0 : i32
    %c0_i32_1 = arith.constant 0 : i32
    return %c0_i32, %c0_i32_0 : i32, i32
  }
  func.func @transform_3(%arg0: i32) -> (i32, i32) {
    %c0_i32 = arith.constant 0 : i32
    %c0_i32_0 = arith.constant 0 : i32
    return %arg0, %c0_i32 : i32, i32
  }
}

</mosaic_0001>

<llo_original>
// kernel: tpu_custom_call.1
$region0: #{tpu_custom_call.1}
  #allocation0 [shape = 'u32[]', space=smem, size = 0x4, offset = 0x4, fixed_abs, tag = 'smem constant byte address 0x4 - core index']
  #allocation1 [shape = 'u32[144,128]{1,0:T(1,128)}', space=vmem, size = 0x12000, scoped, tag = 'internal scratch']
  %s0 = inlined_call_operand.vmem [shape: bf16[128,40], index: 0, kind: input, shape index: {}]
  %s1 = inlined_call_operand.vmem [shape: bf16[40,32], index: 1, kind: input, shape index: {}]
  %s2 = inlined_call_operand.vmem [shape: f32[32,32], index: 2, kind: input, shape index: {}]
  %s3 = inlined_call_operand.vmem [shape: f32[128,32], index: 3, kind: output, shape index: {}]
  %s4 = sld [smem:[#allocation0]]
  $region45: #{tpu_custom_call.1} parent=0
    _
  %s6 = ssub.s32 1, %s4
  %s7 = scalar_select 0, %s6, %s4
  loop: start=0, step=1, limit=4
  $region2: #{tpu_custom_call.1} parent=0 // loop_pre_header
    _
  $region3: #{tpu_custom_call.1} parent=0 // loop_header
    %s9 = sphi 0, %s13
    %p10 = scmp.ge.s32.totalorder %s9, 4
    %s19 = sphi 0, %s21
    %s22 = sphi 0, %s19
    %s23 = sphi 0, %s22
    %s39 = sphi 0, %s23
    %s43 = sphi 0, %s43
    %s45 = sphi 0, %s43
    %s46 = sphi 0, %s45
    %s60 = sphi 0, %s46
    %s64 = sphi 0, %s64
    %s66 = sphi 0, %s64
    %s67 = sphi 0, %s66
    %s81 = sphi 0, %s67
    %s87 = sphi 0, %s89
    %s90 = sphi 0, %s87
    %s91 = sphi 0, %s90
    %s107 = sphi 0, %s91
  $region4: #{tpu_custom_call.1} parent=0 // loop_header_branch
    %12 = sbr.rel (%p10) target = $region8
  $region5: #{tpu_custom_call.1} parent=0 // loop_body
    %s14 = ssub.s32 %s9, 1
    %s15 = ssub.s32 %s9, 2
    %s16 = sadd.s32 %s9, 1
    %s17 = ssub.s32 %s9, %s16
    %p18 = scmp.eq.s32.totalorder %s17, 0
    %s20 = sadd.s32 %s19, 1
    %s21 = scalar_select %p18, %s19, %s20
    %p24 = pneg %p18
    %p25 = scmp.eq.s32.totalorder %s9, 1
    %p26 = por %p24, %p25
    %p27 = scmp.ne.s32.totalorder %s19, %s22
    %p28 = scmp.eq.s32.totalorder %s9, 0
    %p29 = por %p27, %p28
    %p30 = scmp.ne.s32.totalorder %s19, %s22
    %p31 = scmp.eq.s32.totalorder %s14, 1
    %p32 = por %p30, %p31
    %p33 = scmp.ne.s32.totalorder %s22, %s23
    %p34 = scmp.eq.s32.totalorder %s14, 0
    %p35 = por %p33, %p34
    %p36 = scmp.ne.s32.totalorder %s22, %s23
    %p37 = scmp.eq.s32.totalorder %s15, 1
    %p38 = por %p36, %p37
    %p40 = scmp.ne.s32.totalorder %s23, %s39
    %p41 = scmp.eq.s32.totalorder %s15, 0
    %p42 = por %p40, %p41
    %s44 = sadd.s32 %s43, 1
    %p47 = scmp.eq.s32.totalorder %s9, 1
    %p48 = scmp.ne.s32.totalorder %s43, %s45
    %p49 = scmp.eq.s32.totalorder %s9, 0
    %p50 = por %p48, %p49
    %p51 = scmp.ne.s32.totalorder %s43, %s45
    %p52 = scmp.eq.s32.totalorder %s14, 1
    %p53 = por %p51, %p52
    %p54 = scmp.ne.s32.totalorder %s45, %s46
    %p55 = scmp.eq.s32.totalorder %s14, 0
    %p56 = por %p54, %p55
    %p57 = scmp.ne.s32.totalorder %s45, %s46
    %p58 = scmp.eq.s32.totalorder %s15, 1
    %p59 = por %p57, %p58
    %p61 = scmp.ne.s32.totalorder %s46, %s60
    %p62 = scmp.eq.s32.totalorder %s15, 0
    %p63 = por %p61, %p62
    %s65 = sadd.s32 %s64, 1
    %p68 = scmp.eq.s32.totalorder %s9, 1
    %p69 = scmp.ne.s32.totalorder %s64, %s66
    %p70 = scmp.eq.s32.totalorder %s9, 0
    %p71 = por %p69, %p70
    %p72 = scmp.ne.s32.totalorder %s64, %s66
    %p73 = scmp.eq.s32.totalorder %s14, 1
    %p74 = por %p72, %p73
    %p75 = scmp.ne.s32.totalorder %s66, %s67
    %p76 = scmp.eq.s32.totalorder %s14, 0
    %p77 = por %p75, %p76
    %p78 = scmp.ne.s32.totalorder %s66, %s67
    %p79 = scmp.eq.s32.totalorder %s15, 1
    %p80 = por %p78, %p79
    %p82 = scmp.ne.s32.totalorder %s67, %s81
    %p83 = scmp.eq.s32.totalorder %s15, 0
    %p84 = por %p82, %p83
    %s85 = ssub.s32 %s9, %s16
    %p86 = scmp.eq.s32.totalorder %s85, 0
    %s88 = sadd.s32 %s87, 1
    %s89 = scalar_select %p86, %s87, %s88
    %p92 = pneg %p86
    %p93 = scmp.eq.s32.totalorder %s9, 1
    %p94 = por %p92, %p93
    %p95 = scmp.ne.s32.totalorder %s87, %s90
    %p96 = scmp.eq.s32.totalorder %s9, 0
    %p97 = por %p95, %p96
    %p98 = scmp.ne.s32.totalorder %s87, %s90
    %p99 = scmp.eq.s32.totalorder %s14, 1
    %p100 = por %p98, %p99
    %p101 = scmp.ne.s32.totalorder %s90, %s91
    %p102 = scmp.eq.s32.totalorder %s14, 0
    %p103 = por %p101, %p102
    %p104 = scmp.ne.s32.totalorder %s90, %s91
    %p105 = scmp.eq.s32.totalorder %s15, 1
    %p106 = por %p104, %p105
    %p108 = scmp.ne.s32.totalorder %s91, %s107
    %p109 = scmp.eq.s32.totalorder %s15, 0
    %p110 = por %p108, %p109
    %p111 = scmp.le.s32.totalorder 1, %s9
    %p112 = scmp.lt.s32.totalorder %s9, 3
    %p113 = pnand %p111, %p112
    %p114 = pneg %p113
    // Predicated region
    $region9: #{tpu_custom_call.1} parent=5 // pred_check
      _
    $region10: #{tpu_custom_call.1} parent=5 // pred_check_branch
      %116 = sbr.rel (%p113) target = $region12
    $region11: #{tpu_custom_call.1} parent=5 // pred_region
      %s117 = ssub.s32 %s9, 1
      // Predicated region
      $region13: #{tpu_custom_call.1} parent=11 // pred_check
        %p118 = pneg %p56
      $region14: #{tpu_custom_call.1} parent=11 // pred_check_branch
        %120 = sbr.rel (%p118) target = $region16
      $region15: #{tpu_custom_call.1} parent=11 // pred_region
        _
      $region16: #{tpu_custom_call.1} parent=11 // pred_fallthru
        _
      // Predicated region
      $region17: #{tpu_custom_call.1} parent=11 // pred_check
        %p121 = pneg %p77
      $region18: #{tpu_custom_call.1} parent=11 // pred_check_branch
        %123 = sbr.rel (%p121) target = $region20
      $region19: #{tpu_custom_call.1} parent=11 // pred_region
        _
      $region20: #{tpu_custom_call.1} parent=11 // pred_fallthru
        _
    $region12: #{tpu_custom_call.1} parent=5 // pred_fallthru
      _
    %p124 = scmp.lt.s32.totalorder %s9, 2
    // Predicated region
    $region21: #{tpu_custom_call.1} parent=5 // pred_check
      %p125 = pneg %p124
    $region22: #{tpu_custom_call.1} parent=5 // pred_check_branch
      %127 = sbr.rel (%p125) target = $region24
    $region23: #{tpu_custom_call.1} parent=5 // pred_region
      // Predicated region
      $region25: #{tpu_custom_call.1} parent=23 // pred_check
        %p128 = pneg %p29
      $region26: #{tpu_custom_call.1} parent=23 // pred_check_branch
        %130 = sbr.rel (%p128) target = $region28
      $region27: #{tpu_custom_call.1} parent=23 // pred_region
        %s131 = smul.u32 8, %s9
        %p132 = scmp.lt.s32.totalorder %s131, 15
        %s133 = scalar_select %p132, %s131, 15
        %s134 = smul.addr %s133, 4
        %s135 = scalar_lea.vmem %s0, %s134
        %s136 = smul.u32 8, %s9
      $region28: #{tpu_custom_call.1} parent=23 // pred_fallthru
        _
    $region24: #{tpu_custom_call.1} parent=5 // pred_fallthru
      _
    %p137 = scmp.le.s32.totalorder 1, %s9
    %p138 = scmp.lt.s32.totalorder %s9, 3
    %p139 = pnand %p137, %p138
    %p140 = pneg %p139
    // Predicated region
    $region29: #{tpu_custom_call.1} parent=5 // pred_check
      _
    $region30: #{tpu_custom_call.1} parent=5 // pred_check_branch
      %142 = sbr.rel (%p139) target = $region32
    $region31: #{tpu_custom_call.1} parent=5 // pred_region
      %s143 = ssub.s32 %s9, 1
      %s144 = smul.u32 8, %s14
      %p145 = scmp.lt.s32.totalorder %s144, 15
      %s146 = scalar_select %p145, %s144, 15
      %s147 = smul.addr %s146, 4
      %s148 = scalar_lea.vmem %s0, %s147
      %p149 = pneg %p35
      %p150 = pneg %p32
      %p151 = pneg %p56
      %p152 = pneg %p53
      %p153 = pneg %p77
      %p154 = pneg %p74
      %p155 = pneg %p103
      %p156 = pneg %p100
      %s157 = smul.u32 8, %s14
      %p158 = scmp.lt.s32.totalorder %s157, 15
      %s159 = scalar_select %p158, %s157, 15
      %s160 = smul.addr %s159, 8
      %s161 = scalar_lea.vmem %s3, %s160
      %s162 = smul.u32 8, %s14
      %p163 = scmp.lt.s32.totalorder %s162, 15
      %s164 = scalar_select %p163, %s162, 15
      %s165 = smul.addr %s164, 4
      %s166 = scalar_lea.vmem %s0, %s165
      %s167 = smul.u32 8, %s14
      %s168 = smul.u32 8, %s14
      %p169 = scmp.lt.s32.totalorder %s168, 15
      %s170 = scalar_select %p169, %s168, 15
      %s171 = smul.addr %s170, 8
      %s172 = scalar_lea.vmem %s3, %s171
      %s173 = smul.u32 8, %s14
      %v175 = vld [vmem:[%s166] sm:$0xf]
      %v176 = vld [vmem:[%s166 + $0x4] sm:$0xf]
      %v177 = vld [vmem:[%s166 + $0x8] sm:$0xf]
      %v178 = vld [vmem:[%s166 + $0xc] sm:$0xf]
      %v179 = vld [vmem:[%s166 + $0x10] sm:$0xf]
      %v180 = vld [vmem:[%s166 + $0x14] sm:$0xf]
      %v181 = vld [vmem:[%s166 + $0x18] sm:$0xf]
      %v182 = vld [vmem:[%s166 + $0x1c] sm:$0xf]
      %v183 = vld [vmem:[%s1] sm:$0xf]
      %v184 = vld [vmem:[%s1 + $0x4] sm:$0xf]
      %v185 = vld [vmem:[%s1 + $0x8] sm:$0xf]
      %v186 = vld [vmem:[%s1 + $0xc] sm:$0xf]
      %v187 = vld [vmem:[%s1 + $0x10] sm:$0xf]
      %v196 = vunpack.c.l.b16 %v175
      %v197 = vunpack.c.l.b16 %v176
      %v198 = vunpack.c.l.b16 %v177
      %v199 = vunpack.c.l.b16 %v178
      %v200 = vunpack.c.l.b16 %v179
      %v201 = vunpack.c.l.b16 %v180
      %v202 = vunpack.c.l.b16 %v181
      %v203 = vunpack.c.l.b16 %v182
      %v204 = vpack.c.b16 %v197, %v196
      %v205 = vpack.c.b16 %v199, %v198
      %v206 = vpack.c.b16 %v201, %v200
      %v207 = vpack.c.b16 %v203, %v202
      %v213 = vunpack.c.l.b16 %v183
      %v214 = vunpack.c.l.b16 %v184
      %v215 = vunpack.c.l.b16 %v185
      %v216 = vunpack.c.l.b16 %v186
      %v217 = vunpack.c.l.b16 %v187
      %v218 = vpack.c.b16 %v214, %v213
      %v219 = vpack.c.b16 %v216, %v215
      %v220 = vpack.c.b16 %v217, %v217
      %vm223 = vcmask 326656
      %v225 = vsel %vm223, %v204, 0
      %v228 = vsel %vm223, %v205, 0
      %v231 = vsel %vm223, %v206, 0
      %v234 = vsel %vm223, %v207, 0
      %vm236 = vcmask 1043456
      %v238 = vsel %vm236, %v220, 0
      %240 = vmatprep.subr.bf16.mxu0 0
      %241 = vmatpush1.bf16.msra.mxu0 %v218
      %242 = vmatprep.subr.bf16.mxu0 0
      %243 = vmatpush1.bf16.msra.mxu0 %v219
      %244 = vmatprep.subr.bf16.mxu0 0
      %245 = vmatpush1.bf16.msra.mxu0 %v238
      %246 = vmatprep.subr.bf16.mxu0 0
      %247 = vmatpush1.bf16.msra.mxu0 0
      %248 = vmatprep.subr.bf16.mxu0 0
      %249 = vmatpush1.bf16.msra.mxu0 0
      %250 = vmatprep.subr.bf16.mxu0 0
      %251 = vmatpush1.bf16.msra.mxu0 0
      %252 = vmatprep.subr.bf16.mxu0 0
      %253 = vmatpush1.bf16.msra.mxu0 0
      %254 = vmatprep.subr.bf16.mxu0 0
      %255 = vmatpush1.bf16.msra.mxu0 0
      %256 = vmatprep.subr.bf16.mxu0 0
      %257 = vmatpush1.bf16.msra.mxu0 0
      %258 = vmatprep.subr.bf16.mxu0 0
      %259 = vmatpush1.bf16.msra.mxu0 0
      %260 = vmatprep.subr.bf16.mxu0 0
      %261 = vmatpush1.bf16.msra.mxu0 0
      %262 = vmatprep.subr.bf16.mxu0 0
      %263 = vmatpush1.bf16.msra.mxu0 0
      %264 = vmatprep.subr.bf16.mxu0 0
      %265 = vmatpush1.bf16.msra.mxu0 0
      %266 = vmatprep.subr.bf16.mxu0 0
      %267 = vmatpush1.bf16.msra.mxu0 0
      %268 = vmatprep.subr.bf16.mxu0 0
      %269 = vmatpush1.bf16.msra.mxu0 0
      %270 = vmatprep.subr.bf16.mxu0 0
      %271 = vmatpush1.bf16.msra.mxu0 0
      %272 = vmatprep.mubr.bf16.mxu0 0
      %273 = vmatmul.mubr.bf16.gmra.mrb[0].mxu0 %v225
      %v274 = vpop.f32.mrb[0].mxu0
      %v275 = vadd.f32 0.0, %v274
      %v276 = vpop.f32.mrb[0].mxu0
      %v277 = vpop.f32.mrb[0].mxu0
      %v278 = vadd.f32 0.0, %v277
      %v279 = vpop.f32.mrb[0].mxu0
      %280 = vmatprep.mubr.bf16.mxu0 0
      %281 = vmatmul.mubr.bf16.gmra.mrb[0].mxu0 %v228
      %v282 = vpop.f32.mrb[0].mxu0
      %v283 = vadd.f32 0.0, %v282
      %v284 = vpop.f32.mrb[0].mxu0
      %v285 = vpop.f32.mrb[0].mxu0
      %v286 = vadd.f32 0.0, %v285
      %v287 = vpop.f32.mrb[0].mxu0
      %288 = vmatprep.mubr.bf16.mxu0 0
      %289 = vmatmul.mubr.bf16.gmra.mrb[0].mxu0 %v231
      %v290 = vpop.f32.mrb[0].mxu0
      %v291 = vadd.f32 0.0, %v290
      %v292 = vpop.f32.mrb[0].mxu0
      %v293 = vpop.f32.mrb[0].mxu0
      %v294 = vadd.f32 0.0, %v293
      %v295 = vpop.f32.mrb[0].mxu0
      %296 = vmatprep.mubr.bf16.mxu0 0
      %297 = vmatmul.mubr.bf16.gmra.mrb[0].mxu0 %v234
      %v298 = vpop.f32.mrb[0].mxu0
      %v299 = vadd.f32 0.0, %v298
      %v300 = vpop.f32.mrb[0].mxu0
      %v301 = vpop.f32.mrb[0].mxu0
      %v302 = vadd.f32 0.0, %v301
      %v303 = vpop.f32.mrb[0].mxu0
      %304 = vdwg.mxu0
      %v305 = vmul.f32 %v275, %v275
      %v306 = vmul.f32 %v278, %v278
      %v307 = vmul.f32 %v283, %v283
      %v308 = vmul.f32 %v286, %v286
      %v309 = vmul.f32 %v291, %v291
      %v310 = vmul.f32 %v294, %v294
      %v311 = vmul.f32 %v299, %v299
      %v312 = vmul.f32 %v302, %v302
      %v313 = vld [vmem:[%s2] sm:$0xff]
      %v314 = vld [vmem:[%s2 + $0x8] sm:$0xff]
      %v315 = vld [vmem:[%s2 + $0x10] sm:$0xff]
      %v316 = vld [vmem:[%s2 + $0x18] sm:$0xff]
      %vm317 = vcmask 261120
      %v319 = vsel %vm317, %v305, 0
      %v322 = vsel %vm317, %v306, 0
      %v325 = vsel %vm317, %v307, 0
      %v328 = vsel %vm317, %v308, 0
      %v331 = vsel %vm317, %v309, 0
      %v334 = vsel %vm317, %v310, 0
      %v337 = vsel %vm317, %v311, 0
      %v340 = vsel %vm317, %v312, 0
      %342 = vmatprep.subr.mxu0 0.0
      %343 = vmatpush1.msra.mxu0 %v313
      %344 = vmatprep.subr.mxu0 0.0
      %345 = vmatpush1.msra.mxu0 %v314
      %346 = vmatprep.subr.mxu0 0.0
      %347 = vmatpush1.msra.mxu0 %v315
      %348 = vmatprep.subr.mxu0 0.0
      %349 = vmatpush1.msra.mxu0 %v316
      %350 = vmatprep.subr.mxu0 0.0
      %351 = vmatpush1.msra.mxu0 0.0
      %352 = vmatprep.subr.mxu0 0.0
      %353 = vmatpush1.msra.mxu0 0.0
      %354 = vmatprep.subr.mxu0 0.0
      %355 = vmatpush1.msra.mxu0 0.0
      %356 = vmatprep.subr.mxu0 0.0
      %357 = vmatpush1.msra.mxu0 0.0
      %358 = vmatprep.subr.mxu0 0.0
      %359 = vmatpush1.msra.mxu0 0.0
      %360 = vmatprep.subr.mxu0 0.0
      %361 = vmatpush1.msra.mxu0 0.0
      %362 = vmatprep.subr.mxu0 0.0
      %363 = vmatpush1.msra.mxu0 0.0
      %364 = vmatprep.subr.mxu0 0.0
      %365 = vmatpush1.msra.mxu0 0.0
      %366 = vmatprep.subr.mxu0 0.0
      %367 = vmatpush1.msra.mxu0 0.0
      %368 = vmatprep.subr.mxu0 0.0
      %369 = vmatpush1.msra.mxu0 0.0
      %370 = vmatprep.subr.mxu0 0.0
      %371 = vmatpush1.msra.mxu0 0.0
      %372 = vmatprep.subr.mxu0 0.0
      %373 = vmatpush1.msra.mxu0 0.0
      %374 = vmatprep.subr.mxu0 0.0
      %375 = vmatpush1.msra.mxu0 0.0
      %376 = vmatprep.subr.mxu0 0.0
      %377 = vmatpush1.msra.mxu0 0.0
      %378 = vmatprep.subr.mxu0 0.0
      %379 = vmatpush1.msra.mxu0 0.0
      %380 = vmatprep.subr.mxu0 0.0
      %381 = vmatpush1.msra.mxu0 0.0
      %382 = vmatprep.subr.mxu0 0.0
      %383 = vmatpush1.msra.mxu0 0.0
      %384 = vmatprep.subr.mxu0 0.0
      %385 = vmatpush1.msra.mxu0 0.0
      %386 = vmatprep.subr.mxu0 0.0
      %387 = vmatpush1.msra.mxu0 0.0
      %388 = vmatprep.subr.mxu0 0.0
      %389 = vmatpush1.msra.mxu0 0.0
      %390 = vmatprep.subr.mxu0 0.0
      %391 = vmatpush1.msra.mxu0 0.0
      %392 = vmatprep.subr.mxu0 0.0
      %393 = vmatpush1.msra.mxu0 0.0
      %394 = vmatprep.subr.mxu0 0.0
      %395 = vmatpush1.msra.mxu0 0.0
      %396 = vmatprep.subr.mxu0 0.0
      %397 = vmatpush1.msra.mxu0 0.0
      %398 = vmatprep.subr.mxu0 0.0
      %399 = vmatpush1.msra.mxu0 0.0
      %400 = vmatprep.subr.mxu0 0.0
      %401 = vmatpush1.msra.mxu0 0.0
      %402 = vmatprep.subr.mxu0 0.0
      %403 = vmatpush1.msra.mxu0 0.0
      %404 = vmatprep.subr.mxu0 0.0
      %405 = vmatpush1.msra.mxu0 0.0
      %406 = vmatprep.mubr.f32.mxu0 0.0
      %407 = vmatmul.mubr.f32.gmra.mrb[0].mxu0 %v319
      %v408 = vpop.f32.mrb[0].mxu0
      %v409 = vadd.f32 0.0, %v408
      %v410 = vpop.f32.mrb[0].mxu0
      %411 = vmatprep.mubr.f32.mxu0 0.0
      %412 = vmatmul.mubr.f32.gmra.mrb[0].mxu0 %v322
      %v413 = vpop.f32.mrb[0].mxu0
      %v414 = vadd.f32 0.0, %v413
      %v415 = vpop.f32.mrb[0].mxu0
      %416 = vmatprep.mubr.f32.mxu0 0.0
      %417 = vmatmul.mubr.f32.gmra.mrb[0].mxu0 %v325
      %v418 = vpop.f32.mrb[0].mxu0
      %v419 = vadd.f32 0.0, %v418
      %v420 = vpop.f32.mrb[0].mxu0
      %421 = vmatprep.mubr.f32.mxu0 0.0
      %422 = vmatmul.mubr.f32.gmra.mrb[0].mxu0 %v328
      %v423 = vpop.f32.mrb[0].mxu0
      %v424 = vadd.f32 0.0, %v423
      %v425 = vpop.f32.mrb[0].mxu0
      %426 = vmatprep.mubr.f32.mxu0 0.0
      %427 = vmatmul.mubr.f32.gmra.mrb[0].mxu0 %v331
      %v428 = vpop.f32.mrb[0].mxu0
      %v429 = vadd.f32 0.0, %v428
      %v430 = vpop.f32.mrb[0].mxu0
      %431 = vmatprep.mubr.f32.mxu0 0.0
      %432 = vmatmul.mubr.f32.gmra.mrb[0].mxu0 %v334
      %v433 = vpop.f32.mrb[0].mxu0
      %v434 = vadd.f32 0.0, %v433
      %v435 = vpop.f32.mrb[0].mxu0
      %436 = vmatprep.mubr.f32.mxu0 0.0
      %437 = vmatmul.mubr.f32.gmra.mrb[0].mxu0 %v337
      %v438 = vpop.f32.mrb[0].mxu0
      %v439 = vadd.f32 0.0, %v438
      %v440 = vpop.f32.mrb[0].mxu0
      %441 = vmatprep.mubr.f32.mxu0 0.0
      %442 = vmatmul.mubr.f32.gmra.mrb[0].mxu0 %v340
      %v443 = vpop.f32.mrb[0].mxu0
      %v444 = vadd.f32 0.0, %v443
      %v445 = vpop.f32.mrb[0].mxu0
      %446 = vdwg.mxu0
      %v447 = vrsqrt.pop %v409
      %v448 = vmul.f32 %v409, %v447
      %vm449 = vcmp.eq.f32.partialorder %v409, inf
      %v450 = vsel %vm449, %v409, %v448
      %vm451 = vcmp.eq.f32.partialorder %v409, 0.0
      %v452 = vand.u32 %v409, 2147483648
      %v453 = vsel %vm451, %v452, %v450
      %v454 = vrsqrt.pop %v414
      %v455 = vmul.f32 %v414, %v454
      %vm456 = vcmp.eq.f32.partialorder %v414, inf
      %v457 = vsel %vm456, %v414, %v455
      %vm458 = vcmp.eq.f32.partialorder %v414, 0.0
      %v459 = vand.u32 %v414, 2147483648
      %v460 = vsel %vm458, %v459, %v457
      %v461 = vrsqrt.pop %v419
      %v462 = vmul.f32 %v419, %v461
      %vm463 = vcmp.eq.f32.partialorder %v419, inf
      %v464 = vsel %vm463, %v419, %v462
      %vm465 = vcmp.eq.f32.partialorder %v419, 0.0
      %v466 = vand.u32 %v419, 2147483648
      %v467 = vsel %vm465, %v466, %v464
      %v468 = vrsqrt.pop %v424
      %v469 = vmul.f32 %v424, %v468
      %vm470 = vcmp.eq.f32.partialorder %v424, inf
      %v471 = vsel %vm470, %v424, %v469
      %vm472 = vcmp.eq.f32.partialorder %v424, 0.0
      %v473 = vand.u32 %v424, 2147483648
      %v474 = vsel %vm472, %v473, %v471
      %v475 = vrsqrt.pop %v429
      %v476 = vmul.f32 %v429, %v475
      %vm477 = vcmp.eq.f32.partialorder %v429, inf
      %v478 = vsel %vm477, %v429, %v476
      %vm479 = vcmp.eq.f32.partialorder %v429, 0.0
      %v480 = vand.u32 %v429, 2147483648
      %v481 = vsel %vm479, %v480, %v478
      %v482 = vrsqrt.pop %v434
      %v483 = vmul.f32 %v434, %v482
      %vm484 = vcmp.eq.f32.partialorder %v434, inf
      %v485 = vsel %vm484, %v434, %v483
      %vm486 = vcmp.eq.f32.partialorder %v434, 0.0
      %v487 = vand.u32 %v434, 2147483648
      %v488 = vsel %vm486, %v487, %v485
      %v489 = vrsqrt.pop %v439
      %v490 = vmul.f32 %v439, %v489
      %vm491 = vcmp.eq.f32.partialorder %v439, inf
      %v492 = vsel %vm491, %v439, %v490
      %vm493 = vcmp.eq.f32.partialorder %v439, 0.0
      %v494 = vand.u32 %v439, 2147483648
      %v495 = vsel %vm493, %v494, %v492
      %v496 = vrsqrt.pop %v444
      %v497 = vmul.f32 %v444, %v496
      %vm498 = vcmp.eq.f32.partialorder %v444, inf
      %v499 = vsel %vm498, %v444, %v497
      %vm500 = vcmp.eq.f32.partialorder %v444, 0.0
      %v501 = vand.u32 %v444, 2147483648
      %v502 = vsel %vm500, %v501, %v499
      %v503 = vadd.f32 %v409, 1.0
      %v504 = vadd.f32 %v414, 1.0
      %v505 = vadd.f32 %v419, 1.0
      %v506 = vadd.f32 %v424, 1.0
      %v507 = vadd.f32 %v429, 1.0
      %v508 = vadd.f32 %v434, 1.0
      %v509 = vadd.f32 %v439, 1.0
      %v510 = vadd.f32 %v444, 1.0
      %v511 = vrcp.pop %v503
      %v512 = vmul.f32 %v453, %v511
      %v513 = vrcp.pop %v504
      %v514 = vmul.f32 %v460, %v513
      %v515 = vrcp.pop %v505
      %v516 = vmul.f32 %v467, %v515
      %v517 = vrcp.pop %v506
      %v518 = vmul.f32 %v474, %v517
      %v519 = vrcp.pop %v507
      %v520 = vmul.f32 %v481, %v519
      %v521 = vrcp.pop %v508
      %v522 = vmul.f32 %v488, %v521
      %v523 = vrcp.pop %v509
      %v524 = vmul.f32 %v495, %v523
      %v525 = vrcp.pop %v510
      %v526 = vmul.f32 %v502, %v525
      %v527 = vmul.f32 %v275, %v512
      %v528 = vmul.f32 %v278, %v514
      %v529 = vmul.f32 %v283, %v516
      %v530 = vmul.f32 %v286, %v518
      %v531 = vmul.f32 %v291, %v520
      %v532 = vmul.f32 %v294, %v522
      %v533 = vmul.f32 %v299, %v524
      %v534 = vmul.f32 %v302, %v526
      %535 = vst.msk [vmem:[%s172] sm:$0xff] %vm317, %v527
      %536 = vst.msk [vmem:[%s172 + $0x8] sm:$0xff] %vm317, %v528
      %537 = vst.msk [vmem:[%s172 + $0x10] sm:$0xff] %vm317, %v529
      %538 = vst.msk [vmem:[%s172 + $0x18] sm:$0xff] %vm317, %v530
      %539 = vst.msk [vmem:[%s172 + $0x20] sm:$0xff] %vm317, %v531
      %540 = vst.msk [vmem:[%s172 + $0x28] sm:$0xff] %vm317, %v532
      %541 = vst.msk [vmem:[%s172 + $0x30] sm:$0xff] %vm317, %v533
      %542 = vst.msk [vmem:[%s172 + $0x38] sm:$0xff] %vm317, %v534
      %s543 = smul.u32 8, %s14
      %p544 = scmp.lt.s32.totalorder %s543, 15
      %s545 = scalar_select %p544, %s543, 15
      %s546 = smul.addr %s545, 8
      %s547 = scalar_lea.vmem %s3, %s546
      // Predicated region
      $region33: #{tpu_custom_call.1} parent=31 // pred_check
        %p548 = pneg %p100
      $region34: #{tpu_custom_call.1} parent=31 // pred_check_branch
        %550 = sbr.rel (%p548) target = $region36
      $region35: #{tpu_custom_call.1} parent=31 // pred_region
        %s551 = smul.u32 8, %s14
      $region36: #{tpu_custom_call.1} parent=31 // pred_fallthru
        _
    $region32: #{tpu_custom_call.1} parent=5 // pred_fallthru
      _
    %p552 = scmp.le.s32.totalorder 2, %s9
    // Predicated region
    $region37: #{tpu_custom_call.1} parent=5 // pred_check
      %p553 = pneg %p552
    $region38: #{tpu_custom_call.1} parent=5 // pred_check_branch
      %555 = sbr.rel (%p553) target = $region40
    $region39: #{tpu_custom_call.1} parent=5 // pred_region
      %s556 = ssub.s32 %s9, 2
      // Predicated region
      $region41: #{tpu_custom_call.1} parent=39 // pred_check
        %p557 = pneg %p106
      $region42: #{tpu_custom_call.1} parent=39 // pred_check_branch
        %559 = sbr.rel (%p557) target = $region44
      $region43: #{tpu_custom_call.1} parent=39 // pred_region
        %s560 = smul.u32 8, %s15
        %p561 = scmp.lt.s32.totalorder %s560, 15
        %s562 = scalar_select %p561, %s560, 15
        %s563 = smul.addr %s562, 8
        %s564 = scalar_lea.vmem %s3, %s563
      $region44: #{tpu_custom_call.1} parent=39 // pred_fallthru
        _
    $region40: #{tpu_custom_call.1} parent=5 // pred_fallthru
      _
  $region6: #{tpu_custom_call.1} parent=0 // loop_footer
    %s13 = sadd.s32 1, %s9
  $region7: #{tpu_custom_call.1} parent=0 // loop_footer_branch
    %8 = sbr.rel target = $region3
  $region8: #{tpu_custom_call.1} parent=0 // loop_exit
    _

</llo_original>
